<compile_context>
chip_gen: v7x
topology: tpu7x:2x2x1
jax: 0.10.0
libtpu: 0.0.40
codegen_flags: <defaults>
</compile_context>

<pallas_src>
import functools

import jax
import jax.numpy as jnp
from jax import lax
from jax.experimental import pallas as pl
from jax.experimental.pallas import tpu as pltpu


def _entropy_rows_kernel(x_ref, ent_ref, m_ref, s_ref, t_ref, *,
                         n_rows, n_cols, mask_cols, mask_rows, use_mxu_row_sums):
    """Per-(row-tile, col-tile) step of the entropy-of-softmax reduction.

    Running stats per row (in VMEM scratch, reset at the first column tile):
      m = running max(x),  s = sum exp(x - m),  t = sum exp(x - m) * x
    Entropy of the softmax row:  H = log(s) + m - t / s.
    """
    i = pl.program_id(0)                       # row-tile index  ("parallel")
    j = pl.program_id(1)                       # col-tile index  ("arbitrary", innermost)
    tm, tc = x_ref.shape

    @pl.when(j == 0)
    def _reset():
        m_ref[...] = jnp.full_like(m_ref, -jnp.inf)
        s_ref[...] = jnp.zeros_like(s_ref)
        t_ref[...] = jnp.zeros_like(t_ref)

    x = x_ref[...].astype(jnp.float32)         # native-dtype load, f32 only in-kernel
    if mask_cols:
        # Block may extend past C: mask padded columns with a large *finite* negative
        # value so exp underflows to exactly 0 and garbage never enters m / s / t.
        col_ids = j * tc + lax.broadcasted_iota(jnp.int32, (1, tc), 1)
        x = jnp.where(col_ids < n_cols, x, -3.0e38)

    m_old = m_ref[...]
    m_new = jnp.maximum(m_old, jnp.max(x, axis=-1, keepdims=True))
    alpha = jnp.exp(m_old - m_new)             # EUP; exactly 0 on the first column tile
    e = jnp.exp(x - m_new)                     # e in [0, 1]

    if use_mxu_row_sums:
        # v7x / bf16-v6e option: move the two per-row reductions to the idle MXU.
        ones = jnp.ones((tc, 1), jnp.float32)
        row_s = jnp.dot(e, ones, preferred_element_type=jnp.float32)
        row_t = jnp.dot(e * x, ones, preferred_element_type=jnp.float32)
    else:
        row_s = jnp.sum(e, axis=-1, keepdims=True)
        row_t = jnp.sum(e * x, axis=-1, keepdims=True)

    s_ref[...] = alpha * s_ref[...] + row_s
    t_ref[...] = alpha * t_ref[...] + row_t
    m_ref[...] = m_new

    @pl.when(j == pl.num_programs(1) - 1)
    def _finalize():
        s = s_ref[...]
        # Exact divide: off the hot loop, (TM,1) elements once per row tile.
        ent = jnp.log(s) + m_ref[...] - t_ref[...] / s
        if mask_rows:
            row_ids = i * tm + lax.broadcasted_iota(jnp.int32, (tm, 1), 0)
            ent = jnp.where(row_ids < n_rows, ent, 0.0)
        ent_ref[...] = ent


def max_entropy_fixed_loss(logits, reduction="mean", *,
                           col_block=2048,
                           vmem_budget_bytes=24 << 20,
                           use_mxu_row_sums=False):
    """Entropy-of-softmax loss (MaxEntropyFixedLoss.forward). `reduction` in {'mean','sum'}."""
    B, C = logits.shape
    in_bytes = logits.dtype.itemsize

    # ---- column tile: whole row if it fits, else <=2048-lane tiles (multiple of 128).
    col_block = max(128, (col_block // 128) * 128)
    tc = C if C <= col_block else col_block
    n_col_tiles = pl.cdiv(C, tc)
    mask_cols = (C % tc) != 0

    # ---- row tile from the VMEM budget:
    # per-row cost ~= tc * (2*in_bytes   [double-buffered input DMA]
    #                        + 12        [~3 live f32 (tm,tc) temporaries: x, e, e*x])
    per_row_bytes = tc * (2 * in_bytes + 12)
    tm = int(vmem_budget_bytes // per_row_bytes)
    tm = max(8, min(tm, 4096))
    tm -= tm % 8                      # (8,128) tiling constraint on the sublane axis
    if tm >= B:
        tm = B                        # full dim is always a legal block size
    n_row_tiles = pl.cdiv(B, tm)
    mask_rows = (B % tm) != 0

    # ---- explicit scoped-VMEM limit (double-buffered input + f32 temporaries + margin),
    # capped so it also fits v7x's 64 MiB physical VMEM.
    work_bytes = 2 * tm * tc * in_bytes + 4 * tm * tc * 4
    vmem_limit = int(min(max(work_bytes * 13 // 10 + (2 << 20), 16 << 20), 48 << 20))

    kernel = functools.partial(
        _entropy_rows_kernel,
        n_rows=B, n_cols=C,
        mask_cols=mask_cols, mask_rows=mask_rows,
        use_mxu_row_sums=use_mxu_row_sums)

    ent_rows = pl.pallas_call(
        kernel,
        out_shape=jax.ShapeDtypeStruct((B, 1), jnp.float32),
        grid_spec=pltpu.PrefetchScalarGridSpec(
            num_scalar_prefetch=0,
            grid=(n_row_tiles, n_col_tiles),
            in_specs=[pl.BlockSpec((tm, tc), lambda i, j: (i, j))],
            out_specs=pl.BlockSpec((tm, 1), lambda i, j: (i, 0)),
            scratch_shapes=[pltpu.VMEM((tm, 1), jnp.float32),   # running max m
                            pltpu.VMEM((tm, 1), jnp.float32),   # running sum s
                            pltpu.VMEM((tm, 1), jnp.float32)],  # running sum t = sum(e*x)
        ),
        compiler_params=pltpu.CompilerParams(
            dimension_semantics=("parallel", "arbitrary"),
            vmem_limit_bytes=vmem_limit),
    )(logits)

    if reduction == "mean":
        return jnp.mean(ent_rows)
    return jnp.sum(ent_rows)


def _reference(logits, reduction="mean"):
    p = jax.nn.softmax(logits, axis=-1)
    ent = -jnp.sum(jax.nn.log_softmax(logits, axis=-1) * p, axis=-1)
    return jnp.mean(ent) if reduction == "mean" else jnp.sum(ent)


if __name__ == "__main__":
    key = jax.random.PRNGKey(0)

    # Small shape consistent with the module's forward: batch=8, n_classes=32.
    B, C = 8, 32
    logits = jax.random.normal(key, (B, C), dtype=jnp.float32)

    loss = max_entropy_fixed_loss(logits, reduction="mean")
    jax.block_until_ready(loss)
    assert jnp.allclose(loss, _reference(logits, "mean"), rtol=1e-4, atol=1e-4)

    loss_sum = max_entropy_fixed_loss(logits, reduction="sum")
    jax.block_until_ready(loss_sum)
    assert jnp.allclose(loss_sum, _reference(logits, "sum"), rtol=1e-4, atol=1e-4)

    # Exercise the tiled path (multiple row tiles + column tiles, masked tails, bf16
    # input) at a still-small shape by shrinking the VMEM budget.
    B2, C2 = 37, 2500
    logits2 = jax.random.normal(jax.random.PRNGKey(1), (B2, C2), dtype=jnp.bfloat16)
    loss2 = max_entropy_fixed_loss(logits2, reduction="mean", vmem_budget_bytes=500_000)
    jax.block_until_ready(loss2)
    ref2 = _reference(logits2.astype(jnp.float32), "mean")
    assert jnp.allclose(loss2, ref2, rtol=1e-3, atol=1e-3)

    print("KERNEL_OK")
</pallas_src>

<mosaic_0001>
module attributes {stable_mosaic.version = 11 : i64} {
  func.func @_entropy_rows_kernel(%arg0: i32, %arg1: i32, %arg2: memref<8x32xf32, #tpu.memory_space<vmem>>, %arg3: memref<8x1xf32, #tpu.memory_space<vmem>>, %arg4: memref<8x1xf32, #tpu.memory_space<vmem>>, %arg5: memref<8x1xf32, #tpu.memory_space<vmem>>, %arg6: memref<8x1xf32, #tpu.memory_space<vmem>>) attributes {dimension_semantics = [#tpu.dimension_semantics<parallel>, #tpu.dimension_semantics<arbitrary>], iteration_bounds = array<i64: 1, 1>, scalar_prefetch = 0 : i64, scratch_operands = 3 : i64, tpu.core_type = #tpu.core_type<tc>, window_params = [{transform_indices = @transform_0, window_bounds = array<i64: 8, 32>}, {transform_indices = @transform_1, window_bounds = array<i64: 8, 1>}]} {
    %c0_i32 = arith.constant 0 : i32
    %0 = arith.cmpi eq, %arg1, %c0_i32 : i32
    %1 = arith.extui %0 : i1 to i32
    %c0_i32_0 = arith.constant 0 : i32
    %2 = arith.cmpi ne, %1, %c0_i32_0 : i32
    scf.if %2 {
      %cst_18 = arith.constant 0xFF800000 : f32
      %30 = vector.broadcast %cst_18 : f32 to vector<8x1xf32>
      %c0_19 = arith.constant 0 : index
      %c0_20 = arith.constant 0 : index
      %31 = vector.load %arg4[%c0_19, %c0_20] : memref<8x1xf32, #tpu.memory_space<vmem>>, vector<8x1xf32>
      tpu.vector_store %arg4[%c0_19, %c0_20], %30 {strides = array<i32>} : memref<8x1xf32, #tpu.memory_space<vmem>>, vector<8x1xf32>,
      %cst_21 = arith.constant 0.000000e+00 : f32
      %32 = vector.broadcast %cst_21 : f32 to vector<8x1xf32>
      %c0_22 = arith.constant 0 : index
      %c0_23 = arith.constant 0 : index
      %33 = vector.load %arg5[%c0_22, %c0_23] : memref<8x1xf32, #tpu.memory_space<vmem>>, vector<8x1xf32>
      tpu.vector_store %arg5[%c0_22, %c0_23], %32 {strides = array<i32>} : memref<8x1xf32, #tpu.memory_space<vmem>>, vector<8x1xf32>,
      %cst_24 = arith.constant 0.000000e+00 : f32
      %34 = vector.broadcast %cst_24 : f32 to vector<8x1xf32>
      %c0_25 = arith.constant 0 : index
      %c0_26 = arith.constant 0 : index
      %35 = vector.load %arg6[%c0_25, %c0_26] : memref<8x1xf32, #tpu.memory_space<vmem>>, vector<8x1xf32>
      tpu.vector_store %arg6[%c0_25, %c0_26], %34 {strides = array<i32>} : memref<8x1xf32, #tpu.memory_space<vmem>>, vector<8x1xf32>,
    } else {
    }
    %c0 = arith.constant 0 : index
    %c0_1 = arith.constant 0 : index
    %3 = vector.load %arg2[%c0, %c0_1] : memref<8x32xf32, #tpu.memory_space<vmem>>, vector<8x32xf32>
    %c0_2 = arith.constant 0 : index
    %c0_3 = arith.constant 0 : index
    %4 = vector.load %arg4[%c0_2, %c0_3] : memref<8x1xf32, #tpu.memory_space<vmem>>, vector<8x1xf32>
    %cst = arith.constant dense<0xFF800000> : vector<8xf32>
    %5 = vector.multi_reduction <maximumf>, %3, %cst [1] : vector<8x32xf32> to vector<8xf32>
    %6 = vector.shape_cast %5 : vector<8xf32> to vector<8x1xf32>
    %7 = arith.maximumf %4, %6 : vector<8x1xf32>
    %8 = arith.subf %4, %7 : vector<8x1xf32>
    %9 = math.exp %8 : vector<8x1xf32>
    %10 = vector.broadcast %7 : vector<8x1xf32> to vector<8x32xf32>
    %11 = arith.subf %3, %10 : vector<8x32xf32>
    %12 = math.exp %11 : vector<8x32xf32>
    %cst_4 = arith.constant dense<0.000000e+00> : vector<8xf32>
    %13 = vector.multi_reduction <add>, %12, %cst_4 [1] : vector<8x32xf32> to vector<8xf32>
    %14 = vector.shape_cast %13 : vector<8xf32> to vector<8x1xf32>
    %15 = arith.mulf %12, %3 : vector<8x32xf32>
    %cst_5 = arith.constant dense<0.000000e+00> : vector<8xf32>
    %16 = vector.multi_reduction <add>, %15, %cst_5 [1] : vector<8x32xf32> to vector<8xf32>
    %17 = vector.shape_cast %16 : vector<8xf32> to vector<8x1xf32>
    %c0_6 = arith.constant 0 : index
    %c0_7 = arith.constant 0 : index
    %18 = vector.load %arg5[%c0_6, %c0_7] : memref<8x1xf32, #tpu.memory_space<vmem>>, vector<8x1xf32>
    %19 = arith.mulf %9, %18 : vector<8x1xf32>
    %20 = arith.addf %19, %14 : vector<8x1xf32>
    %c0_8 = arith.constant 0 : index
    %c0_9 = arith.constant 0 : index
    %21 = vector.load %arg5[%c0_8, %c0_9] : memref<8x1xf32, #tpu.memory_space<vmem>>, vector<8x1xf32>
    tpu.vector_store %arg5[%c0_8, %c0_9], %20 {strides = array<i32>} : memref<8x1xf32, #tpu.memory_space<vmem>>, vector<8x1xf32>,
    %c0_10 = arith.constant 0 : index
    %c0_11 = arith.constant 0 : index
    %22 = vector.load %arg6[%c0_10, %c0_11] : memref<8x1xf32, #tpu.memory_space<vmem>>, vector<8x1xf32>
    %23 = arith.mulf %9, %22 : vector<8x1xf32>
    %24 = arith.addf %23, %17 : vector<8x1xf32>
    %c0_12 = arith.constant 0 : index
    %c0_13 = arith.constant 0 : index
    %25 = vector.load %arg6[%c0_12, %c0_13] : memref<8x1xf32, #tpu.memory_space<vmem>>, vector<8x1xf32>
    tpu.vector_store %arg6[%c0_12, %c0_13], %24 {strides = array<i32>} : memref<8x1xf32, #tpu.memory_space<vmem>>, vector<8x1xf32>,
    %c0_14 = arith.constant 0 : index
    %c0_15 = arith.constant 0 : index
    %26 = vector.load %arg4[%c0_14, %c0_15] : memref<8x1xf32, #tpu.memory_space<vmem>>, vector<8x1xf32>
    tpu.vector_store %arg4[%c0_14, %c0_15], %7 {strides = array<i32>} : memref<8x1xf32, #tpu.memory_space<vmem>>, vector<8x1xf32>,
    %c0_i32_16 = arith.constant 0 : i32
    %27 = arith.cmpi eq, %arg1, %c0_i32_16 : i32
    %28 = arith.extui %27 : i1 to i32
    %c0_i32_17 = arith.constant 0 : i32
    %29 = arith.cmpi ne, %28, %c0_i32_17 : i32
    scf.if %29 {
      %c0_18 = arith.constant 0 : index
      %c0_19 = arith.constant 0 : index
      %30 = vector.load %arg5[%c0_18, %c0_19] : memref<8x1xf32, #tpu.memory_space<vmem>>, vector<8x1xf32>
      %31 = math.log %30 : vector<8x1xf32>
      %c0_20 = arith.constant 0 : index
      %c0_21 = arith.constant 0 : index
      %32 = vector.load %arg4[%c0_20, %c0_21] : memref<8x1xf32, #tpu.memory_space<vmem>>, vector<8x1xf32>
      %33 = arith.addf %31, %32 : vector<8x1xf32>
      %c0_22 = arith.constant 0 : index
      %c0_23 = arith.constant 0 : index
      %34 = vector.load %arg6[%c0_22, %c0_23] : memref<8x1xf32, #tpu.memory_space<vmem>>, vector<8x1xf32>
      %35 = arith.divf %34, %30 : vector<8x1xf32>
      %36 = arith.subf %33, %35 : vector<8x1xf32>
      %c0_24 = arith.constant 0 : index
      %c0_25 = arith.constant 0 : index
      %37 = vector.load %arg3[%c0_24, %c0_25] : memref<8x1xf32, #tpu.memory_space<vmem>>, vector<8x1xf32>
      tpu.vector_store %arg3[%c0_24, %c0_25], %36 {strides = array<i32>} : memref<8x1xf32, #tpu.memory_space<vmem>>, vector<8x1xf32>,
    } else {
    }
    return
  }
  func.func @transform_0(%arg0: i32, %arg1: i32) -> (i32, i32) {
    %c0_i32 = arith.constant 0 : i32
    return %arg0, %arg1 : i32, i32
  }
  func.func @transform_1(%arg0: i32, %arg1: i32) -> (i32, i32) {
    %c0_i32 = arith.constant 0 : i32
    %c0_i32_0 = arith.constant 0 : i32
    return %arg0, %c0_i32 : i32, i32
  }
}

</mosaic_0001>

<llo_original>
// kernel: tpu_custom_call.1
$region0: #{tpu_custom_call.1}
  #allocation0 [shape = 'u32[]', space=smem, size = 0x4, offset = 0x4, fixed_abs, tag = 'smem constant byte address 0x4 - core index']
  #allocation1 [shape = 'u32[144,128]{1,0:T(1,128)}', space=vmem, size = 0x12000, scoped, tag = 'internal scratch']
  #allocation2 [shape = 'f32[8,1]{1,0:T(8,128)}', space=vmem, size = 0x1000, scoped, tag = 'scratch operand']
  #allocation3 [shape = 'f32[8,1]{1,0:T(8,128)}', space=vmem, size = 0x1000, scoped, tag = 'scratch operand']
  #allocation4 [shape = 'f32[8,1]{1,0:T(8,128)}', space=vmem, size = 0x1000, scoped, tag = 'scratch operand']
  %s0 = inlined_call_operand.hbm [shape: f32[8,32], index: 0, kind: input, shape index: {}]
  %s1 = inlined_call_operand.vmem [shape: f32[8,1], index: 1, kind: output, shape index: {}]
  %s2 = sld [smem:[#allocation0]]
  $region26: #{tpu_custom_call.1} parent=0
    _
  %s4 = ssub.s32 1, %s2
  %s5 = scalar_select 0, %s4, %s2
  $region1: #{tpu_custom_call.1} parent=0
    #allocation5 [shape = 'u8[4096]{0}', space=vmem, size = 0x1000, scoped, tag = 'input window, operand 0, single buffered']
    #allocation6 [shape = 's32[1]{0}', space=sflag, size = 0x4, scoped, tag = 'scoped memory for tpu_custom_call.1']
    %6 = vsyncpa [#allocation6], 0
    // Predicated region
    $region2: #{tpu_custom_call.1} parent=1 // pred_check
      _
    $region3: #{tpu_custom_call.1} parent=1 // pred_check_branch
      %8 = sbr.rel (0) target = $region5
    $region4: #{tpu_custom_call.1} parent=1 // pred_region
      %s10 = ssub.s32 128, 128
      %11 = vsyncadd [#allocation6], %s10
      %s13 = sshll.u32 [#allocation5], 4
      %s14 = int_to_ptr.vmem [resolvable:$true] %s13
      %16 = dma.hbm_to_vmem [thread:$0]  %s0, 128, %s14, [#allocation6]
    $region5: #{tpu_custom_call.1} parent=1 // pred_fallthru
      _
    // Predicated region
    $region6: #{tpu_custom_call.1} parent=1 // pred_check
      _
    $region7: #{tpu_custom_call.1} parent=1 // pred_check_branch
      %18 = sbr.rel (0) target = $region9
    $region8: #{tpu_custom_call.1} parent=1 // pred_region
      %19 = dma.done [#allocation6], 128
    $region9: #{tpu_custom_call.1} parent=1 // pred_fallthru
      _
    %p20 = scmp.eq.s32.totalorder 0, 0
    // Predicated region
    $region10: #{tpu_custom_call.1} parent=1 // pred_check
      %p21 = pneg %p20
    $region11: #{tpu_custom_call.1} parent=1 // pred_check_branch
      %23 = sbr.rel (%p21) target = $region13
    $region12: #{tpu_custom_call.1} parent=1 // pred_region
      %vm24 = vcmask 7168
      %25 = vst.msk [vmem:[#allocation2] sm:$0xff] %vm24, -inf
      %26 = vst.msk [vmem:[#allocation3] sm:$0xff] %vm24, 0.0
      %27 = vst.msk [vmem:[#allocation4] sm:$0xff] %vm24, 0.0
    $region13: #{tpu_custom_call.1} parent=1 // pred_fallthru
      _
    %v28 = vld [vmem:[#allocation5] sm:$0xff]
    %v29 = vld [vmem:[#allocation2] sm:$0xff]
    %vm30 = vcmask 261120
    %v31 = vsel %vm30, %v28, -inf
    %32 = vmax.xlane.f32.xlu0 %v31
    %v33 = vpop.xlane.xlu0 %32
    %v34 = vmax.f32 %v29, %v33
    %v35 = vsub.f32 %v29, %v34
    %v36 = vmul.f32 %v35, 1.442695
    %v37 = vpow.pop %v36
    %39 = vset.pattern.permute.xlu0 0
    %40 = vperm.xlu0 %39, %v34
    %v41 = vpop.permute.xlu0 %40
    %v43 = vsub.f32 %v28, %v41
    %v44 = vmul.f32 %v43, 1.442695
    %v45 = vpow.pop %v44
    %v46 = vsel %vm30, %v45, 0.0
    %47 = vadd.xlane.f32.xlu0 %v46
    %v48 = vpop.xlane.xlu0 %47
    %v49 = vmul.f32 %v45, %v28
    %v50 = vsel %vm30, %v49, 0.0
    %51 = vadd.xlane.f32.xlu0 %v50
    %v52 = vpop.xlane.xlu0 %51
    %v53 = vld [vmem:[#allocation3] sm:$0xff]
    %v54 = vmul.f32 %v37, %v53
    %v55 = vadd.f32 %v54, %v48
    %vm56 = vcmask 7168
    %57 = vst.msk [vmem:[#allocation3] sm:$0xff] %vm56, %v55
    %v58 = vld [vmem:[#allocation4] sm:$0xff]
    %v59 = vmul.f32 %v37, %v58
    %v60 = vadd.f32 %v59, %v52
    %61 = vst.msk [vmem:[#allocation4] sm:$0xff] %vm56, %v60
    %62 = vst.msk [vmem:[#allocation2] sm:$0xff] %vm56, %v34
    // Predicated region
    $region14: #{tpu_custom_call.1} parent=1 // pred_check
      %p63 = pneg %p20
    $region15: #{tpu_custom_call.1} parent=1 // pred_check_branch
      %65 = sbr.rel (%p63) target = $region17
    $region16: #{tpu_custom_call.1} parent=1 // pred_region
      %v66 = vld [vmem:[#allocation3] sm:$0xff]
      %v67 = vlog2.pop %v66
      %v68 = vmul.f32 %v67, 0.6931472
      %v69 = vld [vmem:[#allocation2] sm:$0xff]
      %v70 = vadd.f32 %v68, %v69
      %v71 = vld [vmem:[#allocation4] sm:$0xff]
      %v72 = vrcp.pop %v66
      %v73 = vmul.f32 %v71, %v72
      %v74 = vsub.f32 %v70, %v73
      %75 = vst.msk [vmem:[%s1] sm:$0xff] %vm56, %v74
    $region17: #{tpu_custom_call.1} parent=1 // pred_fallthru
      _
    // Predicated region
    $region18: #{tpu_custom_call.1} parent=1 // pred_check
      _
    $region19: #{tpu_custom_call.1} parent=1 // pred_check_branch
      %77 = sbr.rel (0) target = $region21
    $region20: #{tpu_custom_call.1} parent=1 // pred_region
      _
    $region21: #{tpu_custom_call.1} parent=1 // pred_fallthru
      _
    // Predicated region
    $region22: #{tpu_custom_call.1} parent=1 // pred_check
      _
    $region23: #{tpu_custom_call.1} parent=1 // pred_check_branch
      %79 = sbr.rel (0) target = $region25
    $region24: #{tpu_custom_call.1} parent=1 // pred_region
      _
    $region25: #{tpu_custom_call.1} parent=1 // pred_fallthru
      _
    %80 = vsyncpa [#allocation6], 1

</llo_original>
